<compile_context>
chip_gen: v7x
topology: tpu7x:2x2x1
jax: 0.10.0
libtpu: 0.0.40
codegen_flags: <defaults>
</compile_context>

<pallas_src>
import jax
import jax.numpy as jnp
from jax import lax
from jax.experimental import pallas as pl
from jax.experimental.pallas import tpu as pltpu

# ---------------- small, TPU-friendly synthetic sizes -----------------------
BATCH = 2
SEQ = 16
D_MODEL = 128          # "d_model" (roberta-base uses 768; scaled down)
VOC_SIZE = 512         # "voc_size" (50269 in the module; scaled down)
N_MASK = 8             # number of masked positions per example
N_LAYERS = 2
N_HEADS = 4
D_FF = 256
LN_EPS = 1e-5

VMEM_TILE_BUDGET = 24 << 20   # bytes budgeted for the decoder's vocab tiles
VMEM_LIMIT_BYTES = 48 << 20   # scoped VMEM limit (> 16/32 MiB defaults, < 64 MiB v7x)
MIN_VOCAB_STEPS = 4           # keep a multi-step grid so the W2 DMA pipelines


def _round_up(x, m):
    return ((x + m - 1) // m) * m


def pick_vocab_tile(d, m_rows, v, *, budget=VMEM_TILE_BUDGET,
                    min_steps=MIN_VOCAB_STEPS):
    """Vocab tile width from the VMEM budget: lane-dense (x128), multi-step grid.

    Per vocab column (double-buffered): W2 tile (bf16) + out tile (f32).
    At real RoBERTa sizes (D=768, M~64) this yields tv ~ 6912 (<= ~8192, fits
    v7x's 64 MiB VMEM); at the toy sizes here it yields tv=128 -> grid=(4,).
    """
    bytes_per_col = 2 * (d * 2) + 2 * (m_rows * 4)
    tv_budget = max(128, (budget // bytes_per_col) // 128 * 128)
    tv_steps = max(128, _round_up(pl.cdiv(v, min_steps), 128))
    tv = min(tv_budget, tv_steps)
    return tv, _round_up(v, tv)


# =============================================================================
# Pallas kernel 1 (runs once): y = LayerNorm(g @ W1 + b1) * gamma + beta
# =============================================================================
def _proj_ln_kernel(g_ref,        # VMEM [Mp, D] gathered hidden rows (bf16)
                    w1_ref,       # VMEM [D,  D] dense_mlm weight (bf16)
                    consts_ref,   # VMEM [8,  D] rows: b1, gamma, beta, 0...
                    y_ref):       # VMEM [Mp, D] normalized activations (bf16)
    # dense_mlm: bf16 x bf16 on the MXU, f32 accumulation
    z = jnp.dot(g_ref[...], w1_ref[...], preferred_element_type=jnp.float32)
    z = z + consts_ref[0:1, :]

    # nn.LayerNorm(d_model, eps=1e-5): biased variance, affine — all in f32
    mean = jnp.mean(z, axis=-1, keepdims=True)
    var = jnp.mean((z - mean) ** 2, axis=-1, keepdims=True)
    zn = (z - mean) * lax.rsqrt(var + LN_EPS)
    y = zn * consts_ref[1:2, :] + consts_ref[2:3, :]

    y_ref[...] = y.astype(y_ref.dtype)


# =============================================================================
# Pallas kernel 2 (vocab-tiled): logits_tile = y @ W2_tile   (decoder, no bias)
# =============================================================================
def _decoder_kernel(y_ref,        # VMEM [Mp, D ] bf16, resident across steps
                    w2_ref,       # VMEM [D,  tv] bf16 decoder tile (streamed)
                    out_ref):     # VMEM [Mp, tv] f32 logits tile
    out_ref[...] = jnp.dot(y_ref[...], w2_ref[...],
                           preferred_element_type=jnp.float32)


def mlm_head_pallas(hidden_state, mlm_pos, w1, b1, gamma, beta,
                    w2_bf16_pad, v_real, tv):
    """hidden_state: [B,S,D] f32; mlm_pos: [B,P] int32; w2_bf16_pad: [D,Vpad] bf16
    (pre-cast/pre-padded once at init). Returns logits [B, P, v_real] f32."""
    B, S, D = hidden_state.shape
    P = mlm_pos.shape[1]
    M = B * P
    M_pad = _round_up(M, 16)            # sublane-friendly for bf16 blocks too
    v_pad = w2_bf16_pad.shape[1]
    assert v_pad % tv == 0

    # torch.gather(hidden_state, 1, masked_pos) hoisted out of the kernel.
    g = jnp.take_along_axis(hidden_state,
                            mlm_pos[:, :, None].astype(jnp.int32), axis=1)
    g = g.reshape(M, D)
    if M_pad != M:
        g = jnp.pad(g, ((0, M_pad - M), (0, 0)))
    g_bf16 = g.astype(jnp.bfloat16)
    w1_bf16 = w1.astype(jnp.bfloat16)

    # Pack per-feature constants into one sublane-aligned f32 VMEM block.
    consts = jnp.zeros((8, D), jnp.float32)
    consts = consts.at[0].set(b1).at[1].set(gamma).at[2].set(beta)

    # --- kernel 1: one-shot dense_mlm + LayerNorm --------------------------
    y = pl.pallas_call(
        _proj_ln_kernel,
        out_shape=jax.ShapeDtypeStruct((M_pad, D), jnp.bfloat16),
        grid=(1,),
        in_specs=[
            pl.BlockSpec((M_pad, D), lambda i: (0, 0)),
            pl.BlockSpec((D, D), lambda i: (0, 0)),
            pl.BlockSpec((8, D), lambda i: (0, 0)),
        ],
        out_specs=pl.BlockSpec((M_pad, D), lambda i: (0, 0)),
        compiler_params=pltpu.CompilerParams(
            dimension_semantics=("arbitrary",)),
    )(g_bf16, w1_bf16, consts)

    # --- kernel 2: vocab-tiled decoder stream (memory-bound) ---------------
    logits = pl.pallas_call(
        _decoder_kernel,
        out_shape=jax.ShapeDtypeStruct((M_pad, v_pad), jnp.float32),
        grid=(v_pad // tv,),
        in_specs=[
            pl.BlockSpec((M_pad, D), lambda j: (0, 0)),   # y: resident
            pl.BlockSpec((D, tv), lambda j: (0, j)),      # W2 tile: streamed
        ],
        out_specs=pl.BlockSpec((M_pad, tv), lambda j: (0, j)),
        compiler_params=pltpu.CompilerParams(
            dimension_semantics=("parallel",),            # no cross-step state
            vmem_limit_bytes=VMEM_LIMIT_BYTES),
    )(y, w2_bf16_pad)

    return logits[:M, :v_real].reshape(B, P, v_real)


# =============================================================================
# Plain-JAX glue: deterministic synthetic RoBERTa-like encoder (backbone stub)
# =============================================================================
def _layer_norm(x, gamma, beta, eps=LN_EPS):
    mean = jnp.mean(x, axis=-1, keepdims=True)
    var = jnp.mean((x - mean) ** 2, axis=-1, keepdims=True)
    return (x - mean) * lax.rsqrt(var + eps) * gamma + beta


def init_params(key):
    ks = iter(jax.random.split(key, 64))
    s = 0.02

    def lin(k, din, dout):
        return s * jax.random.normal(k, (din, dout), jnp.float32)

    params = {
        "tok_emb": s * jax.random.normal(next(ks), (VOC_SIZE, D_MODEL)),
        "pos_emb": s * jax.random.normal(next(ks), (SEQ, D_MODEL)),
        "emb_ln": (jnp.ones((D_MODEL,)), jnp.zeros((D_MODEL,))),
        "layers": [],
        # MLM head (these feed the Pallas kernels)
        "dense_mlm_w": lin(next(ks), D_MODEL, D_MODEL),
        "dense_mlm_b": jnp.zeros((D_MODEL,)),
        "ln_gamma": jnp.ones((D_MODEL,)),
        "ln_beta": jnp.zeros((D_MODEL,)),
        "decoder_w": lin(next(ks), D_MODEL, VOC_SIZE),   # [D, V] (= weight.T)
    }
    for _ in range(N_LAYERS):
        params["layers"].append({
            "wq": lin(next(ks), D_MODEL, D_MODEL), "bq": jnp.zeros((D_MODEL,)),
            "wk": lin(next(ks), D_MODEL, D_MODEL), "bk": jnp.zeros((D_MODEL,)),
            "wv": lin(next(ks), D_MODEL, D_MODEL), "bv": jnp.zeros((D_MODEL,)),
            "wo": lin(next(ks), D_MODEL, D_MODEL), "bo": jnp.zeros((D_MODEL,)),
            "ln1": (jnp.ones((D_MODEL,)), jnp.zeros((D_MODEL,))),
            "w_ff1": lin(next(ks), D_MODEL, D_FF), "b_ff1": jnp.zeros((D_FF,)),
            "w_ff2": lin(next(ks), D_FF, D_MODEL), "b_ff2": jnp.zeros((D_MODEL,)),
            "ln2": (jnp.ones((D_MODEL,)), jnp.zeros((D_MODEL,))),
        })

    # Decoder weight is cast to bf16 and vocab-padded ONCE here (perf review:
    # do not re-materialize ~hundreds of MB of weight traffic per forward).
    m_rows = _round_up(BATCH * N_MASK, 16)
    tv, v_pad = pick_vocab_tile(D_MODEL, m_rows, VOC_SIZE)
    w2_bf16 = params["decoder_w"].astype(jnp.bfloat16)
    if v_pad != VOC_SIZE:
        w2_bf16 = jnp.pad(w2_bf16, ((0, 0), (0, v_pad - VOC_SIZE)))
    params["decoder_w_bf16"] = w2_bf16
    params["vocab_tile"] = tv
    return params


def encoder_forward(params, input_ids, attn_mask):
    B, S = input_ids.shape
    x = params["tok_emb"][input_ids] + params["pos_emb"][jnp.arange(S)]
    x = _layer_norm(x, *params["emb_ln"])
    add_mask = (1.0 - attn_mask.astype(jnp.float32))[:, None, None, :] * (-1e9)
    hd = D_MODEL // N_HEADS
    for p in params["layers"]:
        q = (x @ p["wq"] + p["bq"]).reshape(B, S, N_HEADS, hd).transpose(0, 2, 1, 3)
        k = (x @ p["wk"] + p["bk"]).reshape(B, S, N_HEADS, hd).transpose(0, 2, 1, 3)
        v = (x @ p["wv"] + p["bv"]).reshape(B, S, N_HEADS, hd).transpose(0, 2, 1, 3)
        scores = jnp.einsum("bhqd,bhkd->bhqk", q, k) / jnp.sqrt(float(hd))
        attn = jax.nn.softmax(scores + add_mask, axis=-1)
        ctx = jnp.einsum("bhqk,bhkd->bhqd", attn, v)
        ctx = ctx.transpose(0, 2, 1, 3).reshape(B, S, D_MODEL)
        x = _layer_norm(x + ctx @ p["wo"] + p["bo"], *p["ln1"])
        ff = jax.nn.gelu(x @ p["w_ff1"] + p["b_ff1"]) @ p["w_ff2"] + p["b_ff2"]
        x = _layer_norm(x + ff, *p["ln2"])
    return x  # [B, S, D]


def roberta_mlm_prompt_forward(params, _input, _mask, _mlm_tokens, _mlm_pos):
    # _mlm_tokens is accepted (as in the PyTorch module) but unused in forward.
    hidden_state = encoder_forward(params, _input, _mask)
    return mlm_head_pallas(hidden_state, _mlm_pos,
                           params["dense_mlm_w"], params["dense_mlm_b"],
                           params["ln_gamma"], params["ln_beta"],
                           params["decoder_w_bf16"],
                           params["decoder_w"].shape[1],
                           params["vocab_tile"])


# Pure-JAX f32 reference for the head (for a correctness cross-check).
def mlm_head_ref(hidden_state, mlm_pos, w1, b1, gamma, beta, w2):
    g = jnp.take_along_axis(hidden_state, mlm_pos[:, :, None].astype(jnp.int32),
                            axis=1)                       # [B, P, D]
    z = g @ w1 + b1
    z = _layer_norm(z, gamma, beta)
    return z @ w2


if __name__ == "__main__":
    key = jax.random.PRNGKey(0)
    k_p, k_in, k_pos, k_tok = jax.random.split(key, 4)

    params = init_params(k_p)
    _input = jax.random.randint(k_in, (BATCH, SEQ), 0, VOC_SIZE, dtype=jnp.int32)
    _mask = jnp.ones((BATCH, SEQ), dtype=jnp.int32)
    _mlm_pos = jax.random.randint(k_pos, (BATCH, N_MASK), 0, SEQ, dtype=jnp.int32)
    _mlm_tokens = jax.random.randint(k_tok, (BATCH, N_MASK), 0, VOC_SIZE,
                                     dtype=jnp.int32)

    logits = roberta_mlm_prompt_forward(params, _input, _mask,
                                        _mlm_tokens, _mlm_pos)
    logits = jax.block_until_ready(logits)

    # cross-check the Pallas head against a pure-JAX (f32) reference
    hidden = encoder_forward(params, _input, _mask)
    ref = mlm_head_ref(hidden, _mlm_pos,
                       params["dense_mlm_w"], params["dense_mlm_b"],
                       params["ln_gamma"], params["ln_beta"],
                       params["decoder_w"])
    assert logits.shape == (BATCH, N_MASK, VOC_SIZE)
    # g / W1 / y / W2 are streamed through the MXU as bf16 (f32 accumulation),
    # so use a relaxed tolerance vs the f32 reference.
    assert jnp.allclose(logits, ref, atol=3e-2, rtol=3e-2)

    print("KERNEL_OK")
</pallas_src>

<mosaic_0001>
module attributes {stable_mosaic.version = 11 : i64} {
  func.func @_proj_ln_kernel(%arg0: i32, %arg1: memref<16x128xbf16, #tpu.memory_space<vmem>>, %arg2: memref<128x128xbf16, #tpu.memory_space<vmem>>, %arg3: memref<8x128xf32, #tpu.memory_space<vmem>>, %arg4: memref<16x128xbf16, #tpu.memory_space<vmem>>) attributes {dimension_semantics = [#tpu.dimension_semantics<arbitrary>], iteration_bounds = array<i64: 1>, scalar_prefetch = 0 : i64, scratch_operands = 0 : i64, tpu.core_type = #tpu.core_type<tc>, window_params = [{pipeline_mode = #tpu.pipeline_mode<synchronous>, transform_indices = @transform_0, window_bounds = array<i64: 16, 128>}, {pipeline_mode = #tpu.pipeline_mode<synchronous>, transform_indices = @transform_1, window_bounds = array<i64: 128, 128>}, {pipeline_mode = #tpu.pipeline_mode<synchronous>, transform_indices = @transform_2, window_bounds = array<i64: 8, 128>}, {pipeline_mode = #tpu.pipeline_mode<synchronous>, transform_indices = @transform_3, window_bounds = array<i64: 16, 128>}]} {
    %c0 = arith.constant 0 : index
    %c0_0 = arith.constant 0 : index
    %0 = vector.load %arg1[%c0, %c0_0] : memref<16x128xbf16, #tpu.memory_space<vmem>>, vector<16x128xbf16>
    %c0_1 = arith.constant 0 : index
    %c0_2 = arith.constant 0 : index
    %1 = vector.load %arg2[%c0_1, %c0_2] : memref<128x128xbf16, #tpu.memory_space<vmem>>, vector<128x128xbf16>
    %cst = arith.constant dense<0.000000e+00> : vector<16x128xf32>
    %2 = tpu.matmul %0, %1, %cst {dimension_numbers = #tpu.dot_dimension_numbers<[1], [0], [0], [1], [0, 0, 1, 1], [], []>} : vector<16x128xbf16>, vector<128x128xbf16>, vector<16x128xf32> -> vector<16x128xf32>
    %c0_3 = arith.constant 0 : index
    %c0_4 = arith.constant 0 : index
    %3 = vector.load %arg3[%c0_3, %c0_4] : memref<8x128xf32, #tpu.memory_space<vmem>>, vector<1x128xf32>
    %4 = vector.broadcast %3 : vector<1x128xf32> to vector<16x128xf32>
    %5 = arith.addf %2, %4 : vector<16x128xf32>
    %cst_5 = arith.constant dense<0.000000e+00> : vector<16xf32>
    %6 = vector.multi_reduction <add>, %5, %cst_5 [1] : vector<16x128xf32> to vector<16xf32>
    %7 = vector.shape_cast %6 : vector<16xf32> to vector<16x1xf32>
    %cst_6 = arith.constant 1.280000e+02 : f32
    %8 = vector.broadcast %cst_6 : f32 to vector<16x1xf32>
    %9 = arith.divf %7, %8 : vector<16x1xf32>
    %10 = vector.broadcast %9 : vector<16x1xf32> to vector<16x128xf32>
    %11 = arith.subf %5, %10 : vector<16x128xf32>
    %12 = arith.mulf %11, %11 : vector<16x128xf32>
    %cst_7 = arith.constant dense<0.000000e+00> : vector<16xf32>
    %13 = vector.multi_reduction <add>, %12, %cst_7 [1] : vector<16x128xf32> to vector<16xf32>
    %14 = vector.shape_cast %13 : vector<16xf32> to vector<16x1xf32>
    %cst_8 = arith.constant 1.280000e+02 : f32
    %15 = vector.broadcast %cst_8 : f32 to vector<16x1xf32>
    %16 = arith.divf %14, %15 : vector<16x1xf32>
    %17 = vector.broadcast %9 : vector<16x1xf32> to vector<16x128xf32>
    %18 = arith.subf %5, %17 : vector<16x128xf32>
    %cst_9 = arith.constant 9.99999974E-6 : f32
    %19 = vector.broadcast %cst_9 : f32 to vector<16x1xf32>
    %20 = arith.addf %16, %19 : vector<16x1xf32>
    %21 = math.rsqrt %20 : vector<16x1xf32>
    %22 = vector.broadcast %21 : vector<16x1xf32> to vector<16x128xf32>
    %23 = arith.mulf %18, %22 : vector<16x128xf32>
    %c1 = arith.constant 1 : index
    %c0_10 = arith.constant 0 : index
    %24 = vector.load %arg3[%c1, %c0_10] : memref<8x128xf32, #tpu.memory_space<vmem>>, vector<1x128xf32>
    %25 = vector.broadcast %24 : vector<1x128xf32> to vector<16x128xf32>
    %26 = arith.mulf %23, %25 : vector<16x128xf32>
    %c2 = arith.constant 2 : index
    %c0_11 = arith.constant 0 : index
    %27 = vector.load %arg3[%c2, %c0_11] : memref<8x128xf32, #tpu.memory_space<vmem>>, vector<1x128xf32>
    %28 = vector.broadcast %27 : vector<1x128xf32> to vector<16x128xf32>
    %29 = arith.addf %26, %28 : vector<16x128xf32>
    %30 = arith.truncf %29 : vector<16x128xf32> to vector<16x128xbf16>
    %c0_12 = arith.constant 0 : index
    %c0_13 = arith.constant 0 : index
    %31 = vector.load %arg4[%c0_12, %c0_13] : memref<16x128xbf16, #tpu.memory_space<vmem>>, vector<16x128xbf16>
    tpu.vector_store %arg4[%c0_12, %c0_13], %30 {strides = array<i32>} : memref<16x128xbf16, #tpu.memory_space<vmem>>, vector<16x128xbf16>,
    return
  }
  func.func @transform_0(%arg0: i32) -> (i32, i32) {
    %c0_i32 = arith.constant 0 : i32
    %c0_i32_0 = arith.constant 0 : i32
    %c0_i32_1 = arith.constant 0 : i32
    return %c0_i32, %c0_i32_0 : i32, i32
  }
  func.func @transform_1(%arg0: i32) -> (i32, i32) {
    %c0_i32 = arith.constant 0 : i32
    %c0_i32_0 = arith.constant 0 : i32
    %c0_i32_1 = arith.constant 0 : i32
    return %c0_i32, %c0_i32_0 : i32, i32
  }
  func.func @transform_2(%arg0: i32) -> (i32, i32) {
    %c0_i32 = arith.constant 0 : i32
    %c0_i32_0 = arith.constant 0 : i32
    %c0_i32_1 = arith.constant 0 : i32
    return %c0_i32, %c0_i32_0 : i32, i32
  }
  func.func @transform_3(%arg0: i32) -> (i32, i32) {
    %c0_i32 = arith.constant 0 : i32
    %c0_i32_0 = arith.constant 0 : i32
    %c0_i32_1 = arith.constant 0 : i32
    return %c0_i32, %c0_i32_0 : i32, i32
  }
}

</mosaic_0001>

<llo_original>
// kernel: tpu_custom_call.1
$region0: #{tpu_custom_call.1}
  #allocation0 [shape = 'u32[]', space=smem, size = 0x4, offset = 0x4, fixed_abs, tag = 'smem constant byte address 0x4 - core index']
  #allocation1 [shape = 'u32[144,128]{1,0:T(1,128)}', space=vmem, size = 0x12000, scoped, tag = 'internal scratch']
  %s0 = inlined_call_operand.hbm [shape: bf16[16,128], index: 0, kind: input, shape index: {}]
  %s1 = inlined_call_operand.hbm [shape: bf16[128,128], index: 1, kind: input, shape index: {}]
  %s2 = inlined_call_operand.hbm [shape: f32[8,128], index: 2, kind: input, shape index: {}]
  %s3 = inlined_call_operand.hbm [shape: bf16[16,128], index: 3, kind: output, shape index: {}]
  %s4 = sld [smem:[#allocation0]]
  $region34: #{tpu_custom_call.1} parent=0
    _
  %s6 = ssub.s32 1, %s4
  %s7 = scalar_select 0, %s6, %s4
  $region1: #{tpu_custom_call.1} parent=0
    #allocation2 [shape = 'u8[4096]{0}', space=vmem, size = 0x1000, scoped, tag = 'input window, operand 0, single buffered']
    #allocation3 [shape = 's32[1]{0}', space=sflag, size = 0x4, scoped, tag = 'scoped memory for tpu_custom_call.1']
    #allocation4 [shape = 's32[1]{0}', space=sflag, size = 0x4, scoped, tag = 'scoped memory for tpu_custom_call.1']
    #allocation5 [shape = 'u8[32768]{0}', space=vmem, size = 0x8000, scoped, tag = 'input window, operand 1, single buffered']
    #allocation6 [shape = 's32[1]{0}', space=sflag, size = 0x4, scoped, tag = 'scoped memory for tpu_custom_call.1']
    #allocation7 [shape = 'u8[4096]{0}', space=vmem, size = 0x1000, scoped, tag = 'input window, operand 2, single buffered']
    #allocation8 [shape = 'u8[4096]{0}', space=vmem, size = 0x1000, scoped, tag = 'output window, operand 0, single buffered']
    %8 = vsyncpa [#allocation3], 0
    %9 = vsyncpa [#allocation6], 0
    %10 = vsyncpa [#allocation4], 0
    // Predicated region
    $region2: #{tpu_custom_call.1} parent=1 // pred_check
      _
    $region3: #{tpu_custom_call.1} parent=1 // pred_check_branch
      %12 = sbr.rel (0) target = $region5
    $region4: #{tpu_custom_call.1} parent=1 // pred_region
      %s14 = ssub.s32 128, 128
      %15 = vsyncadd [#allocation3], %s14
      %s16 = sshll.u32 [#allocation2], 4
      %s17 = int_to_ptr.vmem [resolvable:$true] %s16
      %22 = dma.hbm_to_vmem [thread:$0]  %s0, 128, %s17, [#allocation3], 64, 64, 4
    $region5: #{tpu_custom_call.1} parent=1 // pred_fallthru
      _
    // Predicated region
    $region6: #{tpu_custom_call.1} parent=1 // pred_check
      _
    $region7: #{tpu_custom_call.1} parent=1 // pred_check_branch
      %24 = sbr.rel (0) target = $region9
    $region8: #{tpu_custom_call.1} parent=1 // pred_region
      %s26 = ssub.s32 1024, 1024
      %27 = vsyncadd [#allocation6], %s26
      %s28 = sshll.u32 [#allocation5], 4
      %s29 = int_to_ptr.vmem [resolvable:$true] %s28
      %34 = dma.hbm_to_vmem [thread:$0]  %s1, 1024, %s29, [#allocation6], 64, 64, 4
    $region9: #{tpu_custom_call.1} parent=1 // pred_fallthru
      _
    // Predicated region
    $region10: #{tpu_custom_call.1} parent=1 // pred_check
      _
    $region11: #{tpu_custom_call.1} parent=1 // pred_check_branch
      %36 = sbr.rel (0) target = $region13
    $region12: #{tpu_custom_call.1} parent=1 // pred_region
      %s38 = ssub.s32 128, 128
      %39 = vsyncadd [#allocation6], %s38
      %s41 = sshll.u32 [#allocation7], 4
      %s42 = int_to_ptr.vmem [resolvable:$true] %s41
      %44 = dma.hbm_to_vmem [thread:$0]  %s2, 128, %s42, [#allocation6]
    $region13: #{tpu_custom_call.1} parent=1 // pred_fallthru
      _
    // Predicated region
    $region14: #{tpu_custom_call.1} parent=1 // pred_check
      _
    $region15: #{tpu_custom_call.1} parent=1 // pred_check_branch
      %46 = sbr.rel (0) target = $region17
    $region16: #{tpu_custom_call.1} parent=1 // pred_region
      %47 = dma.done [#allocation3], 128
    $region17: #{tpu_custom_call.1} parent=1 // pred_fallthru
      _
    // Predicated region
    $region18: #{tpu_custom_call.1} parent=1 // pred_check
      _
    $region19: #{tpu_custom_call.1} parent=1 // pred_check_branch
      %49 = sbr.rel (0) target = $region21
    $region20: #{tpu_custom_call.1} parent=1 // pred_region
      %50 = dma.done [#allocation6], 1024
    $region21: #{tpu_custom_call.1} parent=1 // pred_fallthru
      _
    // Predicated region
    $region22: #{tpu_custom_call.1} parent=1 // pred_check
      _
    $region23: #{tpu_custom_call.1} parent=1 // pred_check_branch
      %52 = sbr.rel (0) target = $region25
    $region24: #{tpu_custom_call.1} parent=1 // pred_region
      %53 = dma.done [#allocation6], 128
    $region25: #{tpu_custom_call.1} parent=1 // pred_fallthru
      _
    %v55 = vld [vmem:[#allocation2] sm:$0xf]
    %v56 = vld [vmem:[#allocation2 + $0x4] sm:$0xf]
    %v57 = vld [vmem:[#allocation5] sm:$0xf]
    %v58 = vld [vmem:[#allocation5 + $0x4] sm:$0xf]
    %v59 = vld [vmem:[#allocation5 + $0x8] sm:$0xf]
    %v60 = vld [vmem:[#allocation5 + $0xc] sm:$0xf]
    %v61 = vld [vmem:[#allocation5 + $0x10] sm:$0xf]
    %v62 = vld [vmem:[#allocation5 + $0x14] sm:$0xf]
    %v63 = vld [vmem:[#allocation5 + $0x18] sm:$0xf]
    %v64 = vld [vmem:[#allocation5 + $0x1c] sm:$0xf]
    %v65 = vld [vmem:[#allocation5 + $0x20] sm:$0xf]
    %v66 = vld [vmem:[#allocation5 + $0x24] sm:$0xf]
    %v67 = vld [vmem:[#allocation5 + $0x28] sm:$0xf]
    %v68 = vld [vmem:[#allocation5 + $0x2c] sm:$0xf]
    %v69 = vld [vmem:[#allocation5 + $0x30] sm:$0xf]
    %v70 = vld [vmem:[#allocation5 + $0x34] sm:$0xf]
    %v71 = vld [vmem:[#allocation5 + $0x38] sm:$0xf]
    %v72 = vld [vmem:[#allocation5 + $0x3c] sm:$0xf]
    %v73 = vld [vmem:[#allocation7] sm:$0x1]
    %v74 = vlaneseq
    %v75 = vshrl.u32 %v74, 7
    %v76 = vsub.s32 0, %v75
    %v77 = vrot.slane %v73, %v76
    %v80 = vunpack.c.l.b16 %v55
    %v81 = vunpack.c.l.b16 %v56
    %v82 = vpack.c.b16 %v81, %v80
    %v100 = vunpack.c.l.b16 %v57
    %v101 = vunpack.c.l.b16 %v58
    %v102 = vunpack.c.l.b16 %v59
    %v103 = vunpack.c.l.b16 %v60
    %v104 = vunpack.c.l.b16 %v61
    %v105 = vunpack.c.l.b16 %v62
    %v106 = vunpack.c.l.b16 %v63
    %v107 = vunpack.c.l.b16 %v64
    %v108 = vunpack.c.l.b16 %v65
    %v109 = vunpack.c.l.b16 %v66
    %v110 = vunpack.c.l.b16 %v67
    %v111 = vunpack.c.l.b16 %v68
    %v112 = vunpack.c.l.b16 %v69
    %v113 = vunpack.c.l.b16 %v70
    %v114 = vunpack.c.l.b16 %v71
    %v115 = vunpack.c.l.b16 %v72
    %v116 = vpack.c.b16 %v101, %v100
    %v117 = vpack.c.b16 %v103, %v102
    %v118 = vpack.c.b16 %v105, %v104
    %v119 = vpack.c.b16 %v107, %v106
    %v120 = vpack.c.b16 %v109, %v108
    %v121 = vpack.c.b16 %v111, %v110
    %v122 = vpack.c.b16 %v113, %v112
    %v123 = vpack.c.b16 %v115, %v114
    %132 = vmatprep.subr.bf16.mxu0 0
    %133 = vmatpush1.bf16.msra.mxu0 %v116
    %134 = vmatprep.subr.bf16.mxu0 0
    %135 = vmatpush1.bf16.msra.mxu0 %v117
    %136 = vmatprep.subr.bf16.mxu0 0
    %137 = vmatpush1.bf16.msra.mxu0 %v118
    %138 = vmatprep.subr.bf16.mxu0 0
    %139 = vmatpush1.bf16.msra.mxu0 %v119
    %140 = vmatprep.subr.bf16.mxu0 0
    %141 = vmatpush1.bf16.msra.mxu0 %v120
    %142 = vmatprep.subr.bf16.mxu0 0
    %143 = vmatpush1.bf16.msra.mxu0 %v121
    %144 = vmatprep.subr.bf16.mxu0 0
    %145 = vmatpush1.bf16.msra.mxu0 %v122
    %146 = vmatprep.subr.bf16.mxu0 0
    %147 = vmatpush1.bf16.msra.mxu0 %v123
    %148 = vmatprep.subr.bf16.mxu0 0
    %149 = vmatpush1.bf16.msra.mxu0 0
    %150 = vmatprep.subr.bf16.mxu0 0
    %151 = vmatpush1.bf16.msra.mxu0 0
    %152 = vmatprep.subr.bf16.mxu0 0
    %153 = vmatpush1.bf16.msra.mxu0 0
    %154 = vmatprep.subr.bf16.mxu0 0
    %155 = vmatpush1.bf16.msra.mxu0 0
    %156 = vmatprep.subr.bf16.mxu0 0
    %157 = vmatpush1.bf16.msra.mxu0 0
    %158 = vmatprep.subr.bf16.mxu0 0
    %159 = vmatpush1.bf16.msra.mxu0 0
    %160 = vmatprep.subr.bf16.mxu0 0
    %161 = vmatpush1.bf16.msra.mxu0 0
    %162 = vmatprep.subr.bf16.mxu0 0
    %163 = vmatpush1.bf16.msra.mxu0 0
    %164 = vmatprep.mubr.bf16.mxu0 0
    %165 = vmatmul.mubr.bf16.gmra.mrb[0].mxu0 %v82
    %v166 = vpop.f32.mrb[0].mxu0
    %v167 = vadd.f32 %v77, %v166
    %v168 = vpop.f32.mrb[0].mxu0
    %v169 = vpop.f32.mrb[0].mxu0
    %v170 = vadd.f32 %v77, %v169
    %v171 = vpop.f32.mrb[0].mxu0
    %172 = vdwg.mxu0
    %173 = vadd.xlane.f32.xlu0 %v167
    %v174 = vpop.xlane.xlu0 %173
    %175 = vadd.xlane.f32.xlu0 %v170
    %v176 = vpop.xlane.xlu0 %175
    %v177 = vrcp.pop 128.0
    %v178 = vmul.f32 %v174, %v177
    %v179 = vmul.f32 %v176, %v177
    %v180 = vsub.f32 %v167, %v178
    %v181 = vsub.f32 %v170, %v179
    %v182 = vmul.f32 %v180, %v180
    %v183 = vmul.f32 %v181, %v181
    %184 = vadd.xlane.f32.xlu0 %v182
    %v185 = vpop.xlane.xlu0 %184
    %186 = vadd.xlane.f32.xlu0 %v183
    %v187 = vpop.xlane.xlu0 %186
    %v188 = vmul.f32 %v185, %v177
    %v189 = vmul.f32 %v187, %v177
    %v190 = vadd.f32 %v188, 1e-05
    %v191 = vadd.f32 %v189, 1e-05
    %v192 = vrsqrt.pop %v190
    %v193 = vrsqrt.pop %v191
    %v194 = vmul.f32 %v180, %v192
    %v195 = vmul.f32 %v181, %v193
    %v196 = vld [vmem:[#allocation7 + $0x1] sm:$0x1]
    %v197 = vlaneseq
    %v198 = vshrl.u32 %v197, 7
    %v199 = vsub.s32 0, %v198
    %v200 = vrot.slane %v196, %v199
    %v201 = vmul.f32 %v194, %v200
    %v202 = vmul.f32 %v195, %v200
    %v203 = vld [vmem:[#allocation7 + $0x2] sm:$0x1]
    %v204 = vlaneseq
    %v205 = vshrl.u32 %v204, 7
    %v206 = vsub.s32 0, %v205
    %v207 = vrot.slane %v203, %v206
    %v208 = vadd.f32 %v201, %v207
    %v209 = vadd.f32 %v202, %v207
    %v210 = vpack.c.bf16 %v209, %v208
    %v212 = vunpack.c.l.b16 %v210
    %v213 = vunpack.c.h.b16 %v210
    %v214 = vpack.c.b16 %v212, %v212
    %v215 = vpack.c.b16 %v213, %v213
    %218 = vst [vmem:[#allocation8] sm:$0xf] %v214
    %219 = vst [vmem:[#allocation8 + $0x4] sm:$0xf] %v215
    // Predicated region
    $region26: #{tpu_custom_call.1} parent=1 // pred_check
      _
    $region27: #{tpu_custom_call.1} parent=1 // pred_check_branch
      %221 = sbr.rel (0) target = $region29
    $region28: #{tpu_custom_call.1} parent=1 // pred_region
      %s223 = ssub.s32 128, 128
      %224 = vsyncadd [#allocation4], %s223
      %s225 = sshll.u32 [#allocation8], 4
      %s226 = int_to_ptr.vmem [resolvable:$true] %s225
      %231 = dma.vmem_to_hbm [thread:$0]  %s226, 128, %s3, [#allocation4], 64, 64, 4
    $region29: #{tpu_custom_call.1} parent=1 // pred_fallthru
      _
    // Predicated region
    $region30: #{tpu_custom_call.1} parent=1 // pred_check
      _
    $region31: #{tpu_custom_call.1} parent=1 // pred_check_branch
      %233 = sbr.rel (0) target = $region33
    $region32: #{tpu_custom_call.1} parent=1 // pred_region
      %234 = dma.done [#allocation4], 128
    $region33: #{tpu_custom_call.1} parent=1 // pred_fallthru
      _
    %235 = vsyncpa [#allocation3], 1
    %236 = vsyncpa [#allocation6], 1
    %237 = vsyncpa [#allocation4], 1

</llo_original>
